<compile_context>
chip_gen: v5e
topology: v5e:2x2
jax: 0.10.0
libtpu: 0.0.40
codegen_flags: <defaults>
</compile_context>

<pallas_src>
import numpy as np
import jax
import jax.numpy as jnp
from jax.experimental import pallas as pl
from jax.experimental.pallas import tpu as pltpu

INPUT_DIM = 1
HIDDEN_DIM = 10


def _round_down(n, m):
    return (n // m) * m


def _jnp_forward(x, w1, b1, w2, b2):
    """Plain-jnp reference / fallback path (fused elementwise by XLA)."""
    return jnp.maximum(x @ w1 + b1, 0.0) @ w2 + b2


def _make_mlp_kernel(signs, sub_rows):
    """Build the fused 1->10->1 MLP kernel.

    signs: tuple of 10 Python bools (sign of w2_j) -> specialized 4-op/unit
           path with params = [a(10) | c(10) | b2] where a_j=|w2_j|*w1_j,
           c_j=|w2_j|*b1_j.
           None -> generic 5-op/unit path with params = [w1 | b1 | w2 | b2].
    sub_rows: rows per register-resident sub-slice inside the block.
    """
    hidden = HIDDEN_DIM
    generic = signs is None

    def kernel(params_ref, x_ref, o_ref):
        rows = x_ref.shape[0]
        n_sub = rows // sub_rows

        # Hoist all scalar parameter reads (SMEM, scalar path) out of the loop.
        a = [params_ref[j] for j in range(hidden)]
        c = [params_ref[hidden + j] for j in range(hidden)]
        if generic:
            w2 = [params_ref[2 * hidden + j] for j in range(hidden)]
            b2 = params_ref[3 * hidden]
        else:
            b2 = params_ref[2 * hidden]

        def body(s, carry):
            r0 = pl.multiple_of(s * sub_rows, sub_rows)
            xs = x_ref[pl.ds(r0, sub_rows), :]            # (sub_rows, C) f32
            if generic:
                # 5 ops / hidden unit; b2 folded into the j==0 accumulation.
                acc = b2 + w2[0] * jnp.maximum(a[0] * xs + c[0], 0.0)
                for j in range(1, hidden):
                    acc = acc + w2[j] * jnp.maximum(a[j] * xs + c[j], 0.0)
            else:
                # 4 ops / hidden unit: w2 sign baked in as a Python constant.
                t0 = jnp.maximum(a[0] * xs + c[0], 0.0)
                acc = (b2 + t0) if signs[0] else (b2 - t0)
                for j in range(1, hidden):
                    t = jnp.maximum(a[j] * xs + c[j], 0.0)
                    acc = (acc + t) if signs[j] else (acc - t)
            o_ref[pl.ds(r0, sub_rows), :] = acc            # lane-dense store
            return carry

        jax.lax.fori_loop(0, n_sub, body, 0)

    return kernel


def simple_neural_network(x, w1, b1, w2, b2, *, lane_tile=512, row_tile=1024,
                          small_batch_threshold=4096):
    """Forward pass: relu(x @ w1 + b1) @ w2 + b2.

    x : (B, 1) float32
    w1: (1, HIDDEN_DIM), b1: (1, HIDDEN_DIM)
    w2: (HIDDEN_DIM, 1), b2: (1, 1)
    returns (B, 1) float32
    """
    B, in_dim = x.shape
    assert in_dim == INPUT_DIM == 1

    x = x.astype(jnp.float32)
    w1 = w1.astype(jnp.float32)
    b1 = b1.astype(jnp.float32)
    w2 = w2.astype(jnp.float32)
    b2 = b2.astype(jnp.float32)

    # Lane width: multiple of 128 (auto-corrected rather than asserted).
    C = max(128, _round_down(int(lane_tile), 128))
    full_rows = B // C

    # Small-batch fallback: a padded pallas_call would waste >99% of its work.
    if B < small_batch_threshold or full_rows < 8:
        return _jnp_forward(x, w1, b1, w2, b2)

    # --- parameter packing (and w2-sign specialization when concrete) ------
    w2_flat = w2.reshape(-1)
    try:
        w2_host = np.asarray(jax.device_get(w2_flat))
    except jax.errors.ConcretizationTypeError:
        w2_host = None

    if w2_host is not None:
        signs = tuple(bool(v >= 0.0) for v in w2_host)
        scale = jnp.abs(w2_flat)
        params = jnp.concatenate([
            w1.reshape(-1) * scale,        # a_j = |w2_j| * w1_j
            b1.reshape(-1) * scale,        # c_j = |w2_j| * b1_j
            b2.reshape(-1),
        ])
    else:
        signs = None
        params = jnp.concatenate([
            w1.reshape(-1), b1.reshape(-1), w2_flat, b2.reshape(-1),
        ])

    # --- tile-size selection ------------------------------------------------
    # R: rows per block. Multiple of 8 (16 when possible), <= row_tile, and
    # <= full_rows // 2 so the grid has >= 2 steps (both v7x TensorCores busy).
    row_tile = max(8, _round_down(int(row_tile), 8))
    r_cap = max(8, _round_down(full_rows // 2, 8))
    R = min(row_tile, r_cap)
    if R >= 16:
        R = _round_down(R, 16)
    sub_rows = 16 if R % 16 == 0 else 8

    rows_main = _round_down(full_rows, R)
    B_main = rows_main * C

    # Free reshape view of the leading B_main elements (no pad, no copy when
    # B is a multiple of the block).
    x_flat = x.reshape(-1)
    if B_main == B:
        x_main = x_flat.reshape(rows_main, C)
    else:
        x_main = x_flat[:B_main].reshape(rows_main, C)

    grid = (rows_main // R,)

    out_main = pl.pallas_call(
        _make_mlp_kernel(signs, sub_rows),
        out_shape=jax.ShapeDtypeStruct((rows_main, C), jnp.float32),
        grid=grid,
        in_specs=[
            # Tiny parameter vector lives in scalar memory.
            pl.BlockSpec(memory_space=pltpu.MemorySpace.SMEM),
            # Batch slab, tiled over rows (auto double-buffered, <= 2 MiB/block).
            pl.BlockSpec((R, C), lambda i: (i, 0)),
        ],
        out_specs=pl.BlockSpec((R, C), lambda i: (i, 0)),
        compiler_params=pltpu.CompilerParams(
            dimension_semantics=("parallel",),
        ),
    )(params, x_main)

    if B_main == B:
        return out_main.reshape(B, 1)

    # Tail (< one block-row group of elements): plain jnp, then stitch.
    tail_out = _jnp_forward(x[B_main:], w1, b1, w2, b2)
    return jnp.concatenate([out_main.reshape(B_main, 1), tail_out], axis=0)


if __name__ == "__main__":
    key = jax.random.PRNGKey(0)
    k_w1, k_b1, k_w2, k_b2, k_x0, k_x1, k_x2, k_x3 = jax.random.split(key, 8)

    # PyTorch nn.Linear-style uniform init, stored as (in, out) so math is x @ W + b.
    bound1 = 1.0 / (INPUT_DIM ** 0.5)
    bound2 = 1.0 / (HIDDEN_DIM ** 0.5)
    w1 = jax.random.uniform(k_w1, (INPUT_DIM, HIDDEN_DIM), jnp.float32,
                            minval=-bound1, maxval=bound1)
    b1 = jax.random.uniform(k_b1, (1, HIDDEN_DIM), jnp.float32,
                            minval=-bound1, maxval=bound1)
    w2 = jax.random.uniform(k_w2, (HIDDEN_DIM, 1), jnp.float32,
                            minval=-bound2, maxval=bound2)
    b2 = jax.random.uniform(k_b2, (1, 1), jnp.float32,
                            minval=-bound2, maxval=bound2)

    def ref_fwd(xx):
        return jnp.maximum(xx @ w1 + b1, 0.0) @ w2 + b2

    def check(out, xx):
        assert out.shape == (xx.shape[0], 1)
        assert jnp.allclose(out, ref_fwd(xx), atol=1e-5, rtol=1e-4)

    # 1) Tiny batch (matches the original example) -> small-batch fallback path.
    x0 = jax.random.normal(k_x0, (8, INPUT_DIM), jnp.float32)
    out0 = simple_neural_network(x0, w1, b1, w2, b2)
    jax.block_until_ready(out0)
    check(out0, x0)

    # 2) Kernel path, batch exactly divisible by the block (grid of 2, no tail).
    x1 = jax.random.normal(k_x1, (8192, INPUT_DIM), jnp.float32)
    out1 = simple_neural_network(x1, w1, b1, w2, b2)
    jax.block_until_ready(out1)
    check(out1, x1)

    # 3) Kernel path with a ragged tail (kernel main slab + jnp tail + concat).
    x2 = jax.random.normal(k_x2, (8709, INPUT_DIM), jnp.float32)
    out2 = simple_neural_network(x2, w1, b1, w2, b2)
    jax.block_until_ready(out2)
    check(out2, x2)

    # 4) Larger batch: multi-iteration inner fori_loop, 2-step parallel grid.
    x3 = jax.random.normal(k_x3, (262144, INPUT_DIM), jnp.float32)
    out3 = simple_neural_network(x3, w1, b1, w2, b2)
    jax.block_until_ready(out3)
    check(out3, x3)

    print("KERNEL_OK")
</pallas_src>

<mosaic_0001>
module attributes {stable_mosaic.version = 11 : i64} {
  func.func @kernel(%arg0: i32, %arg1: memref<21xf32, #tpu.memory_space<smem>>, %arg2: memref<8x512xf32, #tpu.memory_space<vmem>>, %arg3: memref<8x512xf32, #tpu.memory_space<vmem>>) attributes {dimension_semantics = [#tpu.dimension_semantics<parallel>], iteration_bounds = array<i64: 2>, scalar_prefetch = 0 : i64, scratch_operands = 0 : i64, tpu.core_type = #tpu.core_type<tc>, window_params = [{transform_indices = @transform_0, window_bounds = array<i64: 21>}, {transform_indices = @transform_1, window_bounds = array<i64: 8, 512>}, {transform_indices = @transform_2, window_bounds = array<i64: 8, 512>}]} {
    %c0 = arith.constant 0 : index
    %0 = memref.load %arg1[%c0] : memref<21xf32, #tpu.memory_space<smem>>
    %c1 = arith.constant 1 : index
    %1 = memref.load %arg1[%c1] : memref<21xf32, #tpu.memory_space<smem>>
    %c2 = arith.constant 2 : index
    %2 = memref.load %arg1[%c2] : memref<21xf32, #tpu.memory_space<smem>>
    %c3 = arith.constant 3 : index
    %3 = memref.load %arg1[%c3] : memref<21xf32, #tpu.memory_space<smem>>
    %c4 = arith.constant 4 : index
    %4 = memref.load %arg1[%c4] : memref<21xf32, #tpu.memory_space<smem>>
    %c5 = arith.constant 5 : index
    %5 = memref.load %arg1[%c5] : memref<21xf32, #tpu.memory_space<smem>>
    %c6 = arith.constant 6 : index
    %6 = memref.load %arg1[%c6] : memref<21xf32, #tpu.memory_space<smem>>
    %c7 = arith.constant 7 : index
    %7 = memref.load %arg1[%c7] : memref<21xf32, #tpu.memory_space<smem>>
    %c8 = arith.constant 8 : index
    %8 = memref.load %arg1[%c8] : memref<21xf32, #tpu.memory_space<smem>>
    %c9 = arith.constant 9 : index
    %9 = memref.load %arg1[%c9] : memref<21xf32, #tpu.memory_space<smem>>
    %c10 = arith.constant 10 : index
    %10 = memref.load %arg1[%c10] : memref<21xf32, #tpu.memory_space<smem>>
    %c11 = arith.constant 11 : index
    %11 = memref.load %arg1[%c11] : memref<21xf32, #tpu.memory_space<smem>>
    %c12 = arith.constant 12 : index
    %12 = memref.load %arg1[%c12] : memref<21xf32, #tpu.memory_space<smem>>
    %c13 = arith.constant 13 : index
    %13 = memref.load %arg1[%c13] : memref<21xf32, #tpu.memory_space<smem>>
    %c14 = arith.constant 14 : index
    %14 = memref.load %arg1[%c14] : memref<21xf32, #tpu.memory_space<smem>>
    %c15 = arith.constant 15 : index
    %15 = memref.load %arg1[%c15] : memref<21xf32, #tpu.memory_space<smem>>
    %c16 = arith.constant 16 : index
    %16 = memref.load %arg1[%c16] : memref<21xf32, #tpu.memory_space<smem>>
    %c17 = arith.constant 17 : index
    %17 = memref.load %arg1[%c17] : memref<21xf32, #tpu.memory_space<smem>>
    %c18 = arith.constant 18 : index
    %18 = memref.load %arg1[%c18] : memref<21xf32, #tpu.memory_space<smem>>
    %c19 = arith.constant 19 : index
    %19 = memref.load %arg1[%c19] : memref<21xf32, #tpu.memory_space<smem>>
    %c20 = arith.constant 20 : index
    %20 = memref.load %arg1[%c20] : memref<21xf32, #tpu.memory_space<smem>>
    %c0_i32 = arith.constant 0 : i32
    %c8_i32 = arith.constant 8 : i32
    %21 = arith.muli %c0_i32, %c8_i32 : i32
    %22 = tpu.assume_multiple %21, 8 : i32
    %23 = arith.index_cast %22 : i32 to index
    %c0_0 = arith.constant 0 : index
    %24 = vector.load %arg2[%23, %c0_0] : memref<8x512xf32, #tpu.memory_space<vmem>>, vector<8x512xf32>
    %25 = vector.broadcast %0 : f32 to vector<8x512xf32>
    %26 = arith.mulf %25, %24 : vector<8x512xf32>
    %27 = vector.broadcast %10 : f32 to vector<8x512xf32>
    %28 = arith.addf %26, %27 : vector<8x512xf32>
    %cst = arith.constant 0.000000e+00 : f32
    %29 = vector.broadcast %cst : f32 to vector<8x512xf32>
    %30 = arith.maximumf %28, %29 : vector<8x512xf32>
    %31 = vector.broadcast %20 : f32 to vector<8x512xf32>
    %32 = arith.addf %31, %30 : vector<8x512xf32>
    %33 = vector.broadcast %1 : f32 to vector<8x512xf32>
    %34 = arith.mulf %33, %24 : vector<8x512xf32>
    %35 = vector.broadcast %11 : f32 to vector<8x512xf32>
    %36 = arith.addf %34, %35 : vector<8x512xf32>
    %cst_1 = arith.constant 0.000000e+00 : f32
    %37 = vector.broadcast %cst_1 : f32 to vector<8x512xf32>
    %38 = arith.maximumf %36, %37 : vector<8x512xf32>
    %39 = arith.addf %32, %38 : vector<8x512xf32>
    %40 = vector.broadcast %2 : f32 to vector<8x512xf32>
    %41 = arith.mulf %40, %24 : vector<8x512xf32>
    %42 = vector.broadcast %12 : f32 to vector<8x512xf32>
    %43 = arith.addf %41, %42 : vector<8x512xf32>
    %cst_2 = arith.constant 0.000000e+00 : f32
    %44 = vector.broadcast %cst_2 : f32 to vector<8x512xf32>
    %45 = arith.maximumf %43, %44 : vector<8x512xf32>
    %46 = arith.subf %39, %45 : vector<8x512xf32>
    %47 = vector.broadcast %3 : f32 to vector<8x512xf32>
    %48 = arith.mulf %47, %24 : vector<8x512xf32>
    %49 = vector.broadcast %13 : f32 to vector<8x512xf32>
    %50 = arith.addf %48, %49 : vector<8x512xf32>
    %cst_3 = arith.constant 0.000000e+00 : f32
    %51 = vector.broadcast %cst_3 : f32 to vector<8x512xf32>
    %52 = arith.maximumf %50, %51 : vector<8x512xf32>
    %53 = arith.subf %46, %52 : vector<8x512xf32>
    %54 = vector.broadcast %4 : f32 to vector<8x512xf32>
    %55 = arith.mulf %54, %24 : vector<8x512xf32>
    %56 = vector.broadcast %14 : f32 to vector<8x512xf32>
    %57 = arith.addf %55, %56 : vector<8x512xf32>
    %cst_4 = arith.constant 0.000000e+00 : f32
    %58 = vector.broadcast %cst_4 : f32 to vector<8x512xf32>
    %59 = arith.maximumf %57, %58 : vector<8x512xf32>
    %60 = arith.addf %53, %59 : vector<8x512xf32>
    %61 = vector.broadcast %5 : f32 to vector<8x512xf32>
    %62 = arith.mulf %61, %24 : vector<8x512xf32>
    %63 = vector.broadcast %15 : f32 to vector<8x512xf32>
    %64 = arith.addf %62, %63 : vector<8x512xf32>
    %cst_5 = arith.constant 0.000000e+00 : f32
    %65 = vector.broadcast %cst_5 : f32 to vector<8x512xf32>
    %66 = arith.maximumf %64, %65 : vector<8x512xf32>
    %67 = arith.addf %60, %66 : vector<8x512xf32>
    %68 = vector.broadcast %6 : f32 to vector<8x512xf32>
    %69 = arith.mulf %68, %24 : vector<8x512xf32>
    %70 = vector.broadcast %16 : f32 to vector<8x512xf32>
    %71 = arith.addf %69, %70 : vector<8x512xf32>
    %cst_6 = arith.constant 0.000000e+00 : f32
    %72 = vector.broadcast %cst_6 : f32 to vector<8x512xf32>
    %73 = arith.maximumf %71, %72 : vector<8x512xf32>
    %74 = arith.addf %67, %73 : vector<8x512xf32>
    %75 = vector.broadcast %7 : f32 to vector<8x512xf32>
    %76 = arith.mulf %75, %24 : vector<8x512xf32>
    %77 = vector.broadcast %17 : f32 to vector<8x512xf32>
    %78 = arith.addf %76, %77 : vector<8x512xf32>
    %cst_7 = arith.constant 0.000000e+00 : f32
    %79 = vector.broadcast %cst_7 : f32 to vector<8x512xf32>
    %80 = arith.maximumf %78, %79 : vector<8x512xf32>
    %81 = arith.subf %74, %80 : vector<8x512xf32>
    %82 = vector.broadcast %8 : f32 to vector<8x512xf32>
    %83 = arith.mulf %82, %24 : vector<8x512xf32>
    %84 = vector.broadcast %18 : f32 to vector<8x512xf32>
    %85 = arith.addf %83, %84 : vector<8x512xf32>
    %cst_8 = arith.constant 0.000000e+00 : f32
    %86 = vector.broadcast %cst_8 : f32 to vector<8x512xf32>
    %87 = arith.maximumf %85, %86 : vector<8x512xf32>
    %88 = arith.addf %81, %87 : vector<8x512xf32>
    %89 = vector.broadcast %9 : f32 to vector<8x512xf32>
    %90 = arith.mulf %89, %24 : vector<8x512xf32>
    %91 = vector.broadcast %19 : f32 to vector<8x512xf32>
    %92 = arith.addf %90, %91 : vector<8x512xf32>
    %cst_9 = arith.constant 0.000000e+00 : f32
    %93 = vector.broadcast %cst_9 : f32 to vector<8x512xf32>
    %94 = arith.maximumf %92, %93 : vector<8x512xf32>
    %95 = arith.subf %88, %94 : vector<8x512xf32>
    %96 = arith.index_cast %22 : i32 to index
    %c0_10 = arith.constant 0 : index
    %97 = vector.load %arg3[%96, %c0_10] : memref<8x512xf32, #tpu.memory_space<vmem>>, vector<8x512xf32>
    tpu.vector_store %arg3[%96, %c0_10], %95 {strides = array<i32>} : memref<8x512xf32, #tpu.memory_space<vmem>>, vector<8x512xf32>,
    %c1_i32 = arith.constant 1 : i32
    return
  }
  func.func @transform_0(%arg0: i32) -> i32 {
    %c0_i32 = arith.constant 0 : i32
    %c0_i32_0 = arith.constant 0 : i32
    return %c0_i32 : i32
  }
  func.func @transform_1(%arg0: i32) -> (i32, i32) {
    %c0_i32 = arith.constant 0 : i32
    %c0_i32_0 = arith.constant 0 : i32
    return %arg0, %c0_i32 : i32, i32
  }
  func.func @transform_2(%arg0: i32) -> (i32, i32) {
    %c0_i32 = arith.constant 0 : i32
    %c0_i32_0 = arith.constant 0 : i32
    return %arg0, %c0_i32 : i32, i32
  }
}

</mosaic_0001>

<llo_original>
// kernel: tpu_custom_call.1
$region0: #{tpu_custom_call.1}
  #allocation0 [shape = 'u32[]', space=smem, size = 0x4, offset = 0x4, fixed_abs, tag = 'smem constant byte address 0x4 - core index']
  #allocation1 [shape = 'u32[72,128]{1,0:T(1,128)}', space=vmem, size = 0x9000, scoped, tag = 'internal scratch']
  %s0 = inlined_call_operand.hbm [shape: f32[21], index: 0, kind: input, shape index: {}]
  %s1 = inlined_call_operand.hbm [shape: f32[16,512], index: 1, kind: input, shape index: {}]
  %s2 = inlined_call_operand.hbm [shape: f32[16,512], index: 2, kind: output, shape index: {}]
  %s3 = sld [smem:[#allocation0]]
  $region49: #{tpu_custom_call.1} parent=0
    _
  %s5 = ssub.s32 1, %s3
  %s6 = scalar_select 0, %s5, %s3
  $region1: #{tpu_custom_call.1} parent=0
    #allocation2 [shape = 'u8[512]{0}', space=smem, size = 0x200, scoped, tag = 'input window, operand 0, single buffered']
    #allocation3 [shape = 's32[2]{0}', space=sflag, size = 0x8, scoped, tag = 'scoped memory for tpu_custom_call.1']
    #allocation4 [shape = 's32[2]{0}', space=sflag, size = 0x8, scoped, tag = 'scoped memory for tpu_custom_call.1']
    #allocation5 [shape = 's32[2]{0}', space=sflag, size = 0x8, scoped, tag = 'scoped memory for tpu_custom_call.1']
    #allocation6 [shape = 'u8[32768]{0}', space=vmem, size = 0x8000, scoped, tag = 'input window, operand 1']
    #allocation7 [shape = 'u8[32768]{0}', space=vmem, size = 0x8000, scoped, tag = 'output window, operand 0']
    %7 = vsyncpa [#allocation5], 0
    %8 = vsyncpa [#allocation3], 0
    %s9 = scalar_lea.sflag [#allocation3], 1
    %10 = vsyncpa %s9, 0
    %11 = vsyncpa [#allocation4], 0
    %s12 = scalar_lea.sflag [#allocation4], 1
    %13 = vsyncpa %s12, 0
    loop: start=0, step=1, limit=4
    $region2: #{tpu_custom_call.1} parent=1 // loop_pre_header
      _
    $region3: #{tpu_custom_call.1} parent=1 // loop_header
      %s15 = sphi 0, %s19
      %p16 = scmp.ge.s32.totalorder %s15, 4
      %s23 = sphi 0, %s23
      %s25 = sphi 0, %s23
      %s26 = sphi 0, %s25
      %s40 = sphi 0, %s26
      %s46 = sphi 0, %s48
      %s49 = sphi 0, %s46
      %s50 = sphi 0, %s49
      %s66 = sphi 0, %s50
      %s72 = sphi 0, %s74
      %s75 = sphi 0, %s72
      %s76 = sphi 0, %s75
      %s92 = sphi 0, %s76
    $region4: #{tpu_custom_call.1} parent=1 // loop_header_branch
      %18 = sbr.rel (%p16) target = $region8
    $region5: #{tpu_custom_call.1} parent=1 // loop_body
      %s20 = ssub.s32 %s15, 1
      %s21 = ssub.s32 %s15, 2
      %s22 = sadd.s32 %s15, 1
      %s24 = sadd.s32 %s23, 1
      %p27 = scmp.eq.s32.totalorder %s15, 1
      %p28 = scmp.ne.s32.totalorder %s23, %s25
      %p29 = scmp.eq.s32.totalorder %s15, 0
      %p30 = por %p28, %p29
      %p31 = scmp.ne.s32.totalorder %s23, %s25
      %p32 = scmp.eq.s32.totalorder %s20, 1
      %p33 = por %p31, %p32
      %p34 = scmp.ne.s32.totalorder %s25, %s26
      %p35 = scmp.eq.s32.totalorder %s20, 0
      %p36 = por %p34, %p35
      %p37 = scmp.ne.s32.totalorder %s25, %s26
      %p38 = scmp.eq.s32.totalorder %s21, 1
      %p39 = por %p37, %p38
      %p41 = scmp.ne.s32.totalorder %s26, %s40
      %p42 = scmp.eq.s32.totalorder %s21, 0
      %p43 = por %p41, %p42
      %s44 = ssub.s32 %s15, %s22
      %p45 = scmp.eq.s32.totalorder %s44, 0
      %s47 = sadd.s32 %s46, 1
      %s48 = scalar_select %p45, %s46, %s47
      %p51 = pneg %p45
      %p52 = scmp.eq.s32.totalorder %s15, 1
      %p53 = por %p51, %p52
      %p54 = scmp.ne.s32.totalorder %s46, %s49
      %p55 = scmp.eq.s32.totalorder %s15, 0
      %p56 = por %p54, %p55
      %p57 = scmp.ne.s32.totalorder %s46, %s49
      %p58 = scmp.eq.s32.totalorder %s20, 1
      %p59 = por %p57, %p58
      %p60 = scmp.ne.s32.totalorder %s49, %s50
      %p61 = scmp.eq.s32.totalorder %s20, 0
      %p62 = por %p60, %p61
      %p63 = scmp.ne.s32.totalorder %s49, %s50
      %p64 = scmp.eq.s32.totalorder %s21, 1
      %p65 = por %p63, %p64
      %p67 = scmp.ne.s32.totalorder %s50, %s66
      %p68 = scmp.eq.s32.totalorder %s21, 0
      %p69 = por %p67, %p68
      %s70 = ssub.s32 %s15, %s22
      %p71 = scmp.eq.s32.totalorder %s70, 0
      %s73 = sadd.s32 %s72, 1
      %s74 = scalar_select %p71, %s72, %s73
      %p77 = pneg %p71
      %p78 = scmp.eq.s32.totalorder %s15, 1
      %p79 = por %p77, %p78
      %p80 = scmp.ne.s32.totalorder %s72, %s75
      %p81 = scmp.eq.s32.totalorder %s15, 0
      %p82 = por %p80, %p81
      %p83 = scmp.ne.s32.totalorder %s72, %s75
      %p84 = scmp.eq.s32.totalorder %s20, 1
      %p85 = por %p83, %p84
      %p86 = scmp.ne.s32.totalorder %s75, %s76
      %p87 = scmp.eq.s32.totalorder %s20, 0
      %p88 = por %p86, %p87
      %p89 = scmp.ne.s32.totalorder %s75, %s76
      %p90 = scmp.eq.s32.totalorder %s21, 1
      %p91 = por %p89, %p90
      %p93 = scmp.ne.s32.totalorder %s76, %s92
      %p94 = scmp.eq.s32.totalorder %s21, 0
      %p95 = por %p93, %p94
      %p96 = scmp.le.s32.totalorder 1, %s15
      %p97 = scmp.lt.s32.totalorder %s15, 3
      %p98 = pnand %p96, %p97
      %p99 = pneg %p98
      // Predicated region
      $region9: #{tpu_custom_call.1} parent=5 // pred_check
        _
      $region10: #{tpu_custom_call.1} parent=5 // pred_check_branch
        %101 = sbr.rel (%p98) target = $region12
      $region11: #{tpu_custom_call.1} parent=5 // pred_region
        %s102 = ssub.s32 %s15, 1
        // Predicated region
        $region13: #{tpu_custom_call.1} parent=11 // pred_check
          %p103 = pneg %p36
        $region14: #{tpu_custom_call.1} parent=11 // pred_check_branch
          %105 = sbr.rel (%p103) target = $region16
        $region15: #{tpu_custom_call.1} parent=11 // pred_region
          %107 = vsyncadd [#allocation5], 0
          %s109 = sshll.u32 %s0, 4
          %s110 = int_to_ptr.hbm [resolvable:$true] %s109
          %112 = dma.hbm_to_smem %s110, 16, [#allocation2], [#allocation5]
        $region16: #{tpu_custom_call.1} parent=11 // pred_fallthru
          _
      $region12: #{tpu_custom_call.1} parent=5 // pred_fallthru
        _
      %p113 = scmp.lt.s32.totalorder %s15, 2
      // Predicated region
      $region17: #{tpu_custom_call.1} parent=5 // pred_check
        %p114 = pneg %p113
      $region18: #{tpu_custom_call.1} parent=5 // pred_check_branch
        %116 = sbr.rel (%p114) target = $region20
      $region19: #{tpu_custom_call.1} parent=5 // pred_region
        // Predicated region
        $region21: #{tpu_custom_call.1} parent=19 // pred_check
          %p117 = pneg %p56
        $region22: #{tpu_custom_call.1} parent=19 // pred_check_branch
          %119 = sbr.rel (%p117) target = $region24
        $region23: #{tpu_custom_call.1} parent=19 // pred_region
          %s120 = sand.u32 %s46, 1
          %s121 = scalar_lea.sflag [#allocation3], %s120
          %s122 = sand.u32 %s46, 1
          %s123 = smul.addr %s122, 32
          %s124 = scalar_lea.vmem [#allocation6], %s123
          %126 = vsyncadd %s121, 0
          %s127 = smul.addr %s15, 4
          %s128 = smul.addr %s127, 8
          %s129 = scalar_lea.hbm %s1, %s128
          %s131 = sshll.u32 %s129, 4
          %s132 = int_to_ptr.hbm [resolvable:$true] %s131
          %s133 = sshll.u32 %s124, 4
          %s134 = int_to_ptr.vmem [resolvable:$true] %s133
          %136 = dma.hbm_to_vmem [thread:$0]  %s132, 512, %s134, %s121
        $region24: #{tpu_custom_call.1} parent=19 // pred_fallthru
          _
      $region20: #{tpu_custom_call.1} parent=5 // pred_fallthru
        _
      %p137 = scmp.le.s32.totalorder 1, %s15
      %p138 = scmp.lt.s32.totalorder %s15, 3
      %p139 = pnand %p137, %p138
      %p140 = pneg %p139
      // Predicated region
      $region25: #{tpu_custom_call.1} parent=5 // pred_check
        _
      $region26: #{tpu_custom_call.1} parent=5 // pred_check_branch
        %142 = sbr.rel (%p139) target = $region28
      $region27: #{tpu_custom_call.1} parent=5 // pred_region
        %s143 = ssub.s32 %s15, 1
        // Predicated region
        $region29: #{tpu_custom_call.1} parent=27 // pred_check
          %p144 = pneg %p36
        $region30: #{tpu_custom_call.1} parent=27 // pred_check_branch
          %146 = sbr.rel (%p144) target = $region32
        $region31: #{tpu_custom_call.1} parent=27 // pred_region
          %148 = dma.done [#allocation5], 16
        $region32: #{tpu_custom_call.1} parent=27 // pred_fallthru
          _
        %s149 = sand.u32 %s49, 1
        %s150 = scalar_lea.sflag [#allocation3], %s149
        %s151 = sand.u32 %s49, 1
        %s152 = smul.addr %s151, 32
        %s153 = scalar_lea.vmem [#allocation6], %s152
        // Predicated region
        $region33: #{tpu_custom_call.1} parent=27 // pred_check
          %p154 = pneg %p62
        $region34: #{tpu_custom_call.1} parent=27 // pred_check_branch
          %156 = sbr.rel (%p154) target = $region36
        $region35: #{tpu_custom_call.1} parent=27 // pred_region
          %158 = dma.done %s150, 512
        $region36: #{tpu_custom_call.1} parent=27 // pred_fallthru
          _
        %159 = sfence
        %p160 = pneg %p36
        %p161 = pneg %p33
        %s162 = sand.u32 %s49, 1
        %s163 = scalar_lea.sflag [#allocation3], %s162
        %s164 = sand.u32 %s49, 1
        %s165 = smul.addr %s164, 32
        %s166 = scalar_lea.vmem [#allocation6], %s165
        %p167 = pneg %p62
        %p168 = pneg %p59
        %p169 = pneg %p88
        %p170 = pneg %p85
        %s171 = sand.u32 %s75, 1
        %s172 = scalar_lea.sflag [#allocation4], %s171
        %s173 = sand.u32 %s75, 1
        %s174 = smul.addr %s173, 32
        %s175 = scalar_lea.vmem [#allocation7], %s174
        %s176 = sld [smem:[#allocation2]]
        %s177 = sld [smem:[#allocation2 + $0x1]]
        %s178 = sld [smem:[#allocation2 + $0x2]]
        %s179 = sld [smem:[#allocation2 + $0x3]]
        %s180 = sld [smem:[#allocation2 + $0x4]]
        %s181 = sld [smem:[#allocation2 + $0x5]]
        %s182 = sld [smem:[#allocation2 + $0x6]]
        %s183 = sld [smem:[#allocation2 + $0x7]]
        %s184 = sld [smem:[#allocation2 + $0x8]]
        %s185 = sld [smem:[#allocation2 + $0x9]]
        %s186 = sld [smem:[#allocation2 + $0xa]]
        %s187 = sld [smem:[#allocation2 + $0xb]]
        %s188 = sld [smem:[#allocation2 + $0xc]]
        %s189 = sld [smem:[#allocation2 + $0xd]]
        %s190 = sld [smem:[#allocation2 + $0xe]]
        %s191 = sld [smem:[#allocation2 + $0xf]]
        %s192 = sld [smem:[#allocation2 + $0x10]]
        %s193 = sld [smem:[#allocation2 + $0x11]]
        %s194 = sld [smem:[#allocation2 + $0x12]]
        %s195 = sld [smem:[#allocation2 + $0x13]]
        %s196 = sld [smem:[#allocation2 + $0x14]]
        %s197 = smul.u32 0, 4
        %s198 = smul.addr %s197, 8
        %s199 = scalar_lea.vmem %s153, %s198 [#allocation6]
        %v200 = vld [vmem:[%s199] sm:$0xff]
        %v201 = vld [vmem:[%s199 + $0x8] sm:$0xff]
        %v202 = vld [vmem:[%s199 + $0x10] sm:$0xff]
        %v203 = vld [vmem:[%s199 + $0x18] sm:$0xff]
        %v204 = vstv %s176
        %v205 = vmul.f32 %v204, %v200
        %v206 = vmul.f32 %v204, %v201
        %v207 = vmul.f32 %v204, %v202
        %v208 = vmul.f32 %v204, %v203
        %v209 = vstv %s186
        %v210 = vadd.f32 %v205, %v209
        %v211 = vadd.f32 %v206, %v209
        %v212 = vadd.f32 %v207, %v209
        %v213 = vadd.f32 %v208, %v209
        %v214 = vmax.f32 %v210, 0.0
        %v215 = vmax.f32 %v211, 0.0
        %v216 = vmax.f32 %v212, 0.0
        %v217 = vmax.f32 %v213, 0.0
        %v218 = vstv %s196
        %v219 = vadd.f32 %v218, %v214
        %v220 = vadd.f32 %v218, %v215
        %v221 = vadd.f32 %v218, %v216
        %v222 = vadd.f32 %v218, %v217
        %v223 = vstv %s177
        %v224 = vmul.f32 %v223, %v200
        %v225 = vmul.f32 %v223, %v201
        %v226 = vmul.f32 %v223, %v202
        %v227 = vmul.f32 %v223, %v203
        %v228 = vstv %s187
        %v229 = vadd.f32 %v224, %v228
        %v230 = vadd.f32 %v225, %v228
        %v231 = vadd.f32 %v226, %v228
        %v232 = vadd.f32 %v227, %v228
        %v233 = vmax.f32 %v229, 0.0
        %v234 = vmax.f32 %v230, 0.0
        %v235 = vmax.f32 %v231, 0.0
        %v236 = vmax.f32 %v232, 0.0
        %v237 = vadd.f32 %v219, %v233
        %v238 = vadd.f32 %v220, %v234
        %v239 = vadd.f32 %v221, %v235
        %v240 = vadd.f32 %v222, %v236
        %v241 = vstv %s178
        %v242 = vmul.f32 %v241, %v200
        %v243 = vmul.f32 %v241, %v201
        %v244 = vmul.f32 %v241, %v202
        %v245 = vmul.f32 %v241, %v203
        %v246 = vstv %s188
        %v247 = vadd.f32 %v242, %v246
        %v248 = vadd.f32 %v243, %v246
        %v249 = vadd.f32 %v244, %v246
        %v250 = vadd.f32 %v245, %v246
        %v251 = vmax.f32 %v247, 0.0
        %v252 = vmax.f32 %v248, 0.0
        %v253 = vmax.f32 %v249, 0.0
        %v254 = vmax.f32 %v250, 0.0
        %v255 = vsub.f32 %v237, %v251
        %v256 = vsub.f32 %v238, %v252
        %v257 = vsub.f32 %v239, %v253
        %v258 = vsub.f32 %v240, %v254
        %v259 = vstv %s179
        %v260 = vmul.f32 %v259, %v200
        %v261 = vmul.f32 %v259, %v201
        %v262 = vmul.f32 %v259, %v202
        %v263 = vmul.f32 %v259, %v203
        %v264 = vstv %s189
        %v265 = vadd.f32 %v260, %v264
        %v266 = vadd.f32 %v261, %v264
        %v267 = vadd.f32 %v262, %v264
        %v268 = vadd.f32 %v263, %v264
        %v269 = vmax.f32 %v265, 0.0
        %v270 = vmax.f32 %v266, 0.0
        %v271 = vmax.f32 %v267, 0.0
        %v272 = vmax.f32 %v268, 0.0
        %v273 = vsub.f32 %v255, %v269
        %v274 = vsub.f32 %v256, %v270
        %v275 = vsub.f32 %v257, %v271
        %v276 = vsub.f32 %v258, %v272
        %v277 = vstv %s180
        %v278 = vmul.f32 %v277, %v200
        %v279 = vmul.f32 %v277, %v201
        %v280 = vmul.f32 %v277, %v202
        %v281 = vmul.f32 %v277, %v203
        %v282 = vstv %s190
        %v283 = vadd.f32 %v278, %v282
        %v284 = vadd.f32 %v279, %v282
        %v285 = vadd.f32 %v280, %v282
        %v286 = vadd.f32 %v281, %v282
        %v287 = vmax.f32 %v283, 0.0
        %v288 = vmax.f32 %v284, 0.0
        %v289 = vmax.f32 %v285, 0.0
        %v290 = vmax.f32 %v286, 0.0
        %v291 = vadd.f32 %v273, %v287
        %v292 = vadd.f32 %v274, %v288
        %v293 = vadd.f32 %v275, %v289
        %v294 = vadd.f32 %v276, %v290
        %v295 = vstv %s181
        %v296 = vmul.f32 %v295, %v200
        %v297 = vmul.f32 %v295, %v201
        %v298 = vmul.f32 %v295, %v202
        %v299 = vmul.f32 %v295, %v203
        %v300 = vstv %s191
        %v301 = vadd.f32 %v296, %v300
        %v302 = vadd.f32 %v297, %v300
        %v303 = vadd.f32 %v298, %v300
        %v304 = vadd.f32 %v299, %v300
        %v305 = vmax.f32 %v301, 0.0
        %v306 = vmax.f32 %v302, 0.0
        %v307 = vmax.f32 %v303, 0.0
        %v308 = vmax.f32 %v304, 0.0
        %v309 = vadd.f32 %v291, %v305
        %v310 = vadd.f32 %v292, %v306
        %v311 = vadd.f32 %v293, %v307
        %v312 = vadd.f32 %v294, %v308
        %v313 = vstv %s182
        %v314 = vmul.f32 %v313, %v200
        %v315 = vmul.f32 %v313, %v201
        %v316 = vmul.f32 %v313, %v202
        %v317 = vmul.f32 %v313, %v203
        %v318 = vstv %s192
        %v319 = vadd.f32 %v314, %v318
        %v320 = vadd.f32 %v315, %v318
        %v321 = vadd.f32 %v316, %v318
        %v322 = vadd.f32 %v317, %v318
        %v323 = vmax.f32 %v319, 0.0
        %v324 = vmax.f32 %v320, 0.0
        %v325 = vmax.f32 %v321, 0.0
        %v326 = vmax.f32 %v322, 0.0
        %v327 = vadd.f32 %v309, %v323
        %v328 = vadd.f32 %v310, %v324
        %v329 = vadd.f32 %v311, %v325
        %v330 = vadd.f32 %v312, %v326
        %v331 = vstv %s183
        %v332 = vmul.f32 %v331, %v200
        %v333 = vmul.f32 %v331, %v201
        %v334 = vmul.f32 %v331, %v202
        %v335 = vmul.f32 %v331, %v203
        %v336 = vstv %s193
        %v337 = vadd.f32 %v332, %v336
        %v338 = vadd.f32 %v333, %v336
        %v339 = vadd.f32 %v334, %v336
        %v340 = vadd.f32 %v335, %v336
        %v341 = vmax.f32 %v337, 0.0
        %v342 = vmax.f32 %v338, 0.0
        %v343 = vmax.f32 %v339, 0.0
        %v344 = vmax.f32 %v340, 0.0
        %v345 = vsub.f32 %v327, %v341
        %v346 = vsub.f32 %v328, %v342
        %v347 = vsub.f32 %v329, %v343
        %v348 = vsub.f32 %v330, %v344
        %v349 = vstv %s184
        %v350 = vmul.f32 %v349, %v200
        %v351 = vmul.f32 %v349, %v201
        %v352 = vmul.f32 %v349, %v202
        %v353 = vmul.f32 %v349, %v203
        %v354 = vstv %s194
        %v355 = vadd.f32 %v350, %v354
        %v356 = vadd.f32 %v351, %v354
        %v357 = vadd.f32 %v352, %v354
        %v358 = vadd.f32 %v353, %v354
        %v359 = vmax.f32 %v355, 0.0
        %v360 = vmax.f32 %v356, 0.0
        %v361 = vmax.f32 %v357, 0.0
        %v362 = vmax.f32 %v358, 0.0
        %v363 = vadd.f32 %v345, %v359
        %v364 = vadd.f32 %v346, %v360
        %v365 = vadd.f32 %v347, %v361
        %v366 = vadd.f32 %v348, %v362
        %v367 = vstv %s185
        %v368 = vmul.f32 %v367, %v200
        %v369 = vmul.f32 %v367, %v201
        %v370 = vmul.f32 %v367, %v202
        %v371 = vmul.f32 %v367, %v203
        %v372 = vstv %s195
        %v373 = vadd.f32 %v368, %v372
        %v374 = vadd.f32 %v369, %v372
        %v375 = vadd.f32 %v370, %v372
        %v376 = vadd.f32 %v371, %v372
        %v377 = vmax.f32 %v373, 0.0
        %v378 = vmax.f32 %v374, 0.0
        %v379 = vmax.f32 %v375, 0.0
        %v380 = vmax.f32 %v376, 0.0
        %v381 = vsub.f32 %v363, %v377
        %v382 = vsub.f32 %v364, %v378
        %v383 = vsub.f32 %v365, %v379
        %v384 = vsub.f32 %v366, %v380
        %s385 = smul.addr %s197, 8
        %s386 = scalar_lea.vmem %s175, %s385 [#allocation7]
        %387 = vst [vmem:[%s386] sm:$0xff] %v381
        %388 = vst [vmem:[%s386 + $0x8] sm:$0xff] %v382
        %389 = vst [vmem:[%s386 + $0x10] sm:$0xff] %v383
        %390 = vst [vmem:[%s386 + $0x18] sm:$0xff] %v384
        %s391 = sand.u32 %s75, 1
        %s392 = scalar_lea.sflag [#allocation4], %s391
        %s393 = sand.u32 %s75, 1
        %s394 = smul.addr %s393, 32
        %s395 = scalar_lea.vmem [#allocation7], %s394
        // Predicated region
        $region37: #{tpu_custom_call.1} parent=27 // pred_check
          %p396 = pneg %p85
        $region38: #{tpu_custom_call.1} parent=27 // pred_check_branch
          %398 = sbr.rel (%p396) target = $region40
        $region39: #{tpu_custom_call.1} parent=27 // pred_region
          %400 = vsyncadd %s392, 0
          %s401 = smul.addr %s20, 4
          %s402 = smul.addr %s401, 8
          %s403 = scalar_lea.hbm %s2, %s402
          %s405 = sshll.u32 %s395, 4
          %s406 = int_to_ptr.vmem [resolvable:$true] %s405
          %s407 = sshll.u32 %s403, 4
          %s408 = int_to_ptr.hbm [resolvable:$true] %s407
          %410 = dma.vmem_to_hbm [thread:$0]  %s406, 512, %s408, %s392
        $region40: #{tpu_custom_call.1} parent=27 // pred_fallthru
          _
      $region28: #{tpu_custom_call.1} parent=5 // pred_fallthru
        _
      %p411 = scmp.le.s32.totalorder 2, %s15
      // Predicated region
      $region41: #{tpu_custom_call.1} parent=5 // pred_check
        %p412 = pneg %p411
      $region42: #{tpu_custom_call.1} parent=5 // pred_check_branch
        %414 = sbr.rel (%p412) target = $region44
      $region43: #{tpu_custom_call.1} parent=5 // pred_region
        %s415 = ssub.s32 %s15, 2
        // Predicated region
        $region45: #{tpu_custom_call.1} parent=43 // pred_check
          %p416 = pneg %p91
        $region46: #{tpu_custom_call.1} parent=43 // pred_check_branch
          %418 = sbr.rel (%p416) target = $region48
        $region47: #{tpu_custom_call.1} parent=43 // pred_region
          %s419 = sand.u32 %s76, 1
          %s420 = scalar_lea.sflag [#allocation4], %s419
          %s421 = sand.u32 %s76, 1
          %s422 = smul.addr %s421, 32
          %s423 = scalar_lea.vmem [#allocation7], %s422
          %425 = dma.done %s420, 512
        $region48: #{tpu_custom_call.1} parent=43 // pred_fallthru
          _
      $region44: #{tpu_custom_call.1} parent=5 // pred_fallthru
        _
    $region6: #{tpu_custom_call.1} parent=1 // loop_footer
      %s19 = sadd.s32 1, %s15
    $region7: #{tpu_custom_call.1} parent=1 // loop_footer_branch
      %14 = sbr.rel target = $region3
    $region8: #{tpu_custom_call.1} parent=1 // loop_exit
      _
    %426 = vsyncpa [#allocation3], 1
    %s427 = scalar_lea.sflag [#allocation3], 1
    %428 = vsyncpa %s427, 1
    %429 = vsyncpa [#allocation4], 1
    %s430 = scalar_lea.sflag [#allocation4], 1
    %431 = vsyncpa %s430, 1
    %432 = vsyncpa [#allocation5], 1
    %s433 = scalar_lea.sflag [#allocation5], 1
    %434 = vsyncpa %s433, 1

</llo_original>
